<compile_context>
chip_gen: v6e
topology: v6e:2x2x1
jax: 0.10.0
libtpu: 0.0.40
codegen_flags: <defaults>
</compile_context>

<pallas_src>
import functools

import jax
import jax.numpy as jnp
from jax.experimental import pallas as pl
from jax.experimental.pallas import tpu as pltpu


# ---------------------------------------------------------------------------
# tile-size helpers (respect the (8, 128) block constraint)
# ---------------------------------------------------------------------------
def _tile_rows(n, target):
    """Sublane-axis tile: full extent if small, else a divisor that is a multiple of 8."""
    if n <= target:
        return n
    for t in range(target, 7, -1):
        if n % t == 0 and t % 8 == 0:
            return t
    return n


def _tile_cols(n, target):
    """Lane-axis tile: full extent if small, else a divisor that is a multiple of 128."""
    if n <= target:
        return n
    for t in range(target, 127, -1):
        if n % t == 0 and t % 128 == 0:
            return t
    return n


_TRANS_B = (((1,), (1,)), ((), ()))  # A(m,k) . B(n,k) -> A @ B.T


# ---------------------------------------------------------------------------
# 1) fused Q/K/V projection
# ---------------------------------------------------------------------------
def qkv_proj_kernel(x_ref, wq_ref, wk_ref, wv_ref, q_ref, k_ref, v_ref):
    x = x_ref[...]                                            # (tm, H)
    q_ref[...] = jax.lax.dot_general(
        x, wq_ref[...], _TRANS_B, preferred_element_type=jnp.float32
    ).astype(q_ref.dtype)
    k_ref[...] = jax.lax.dot_general(
        x, wk_ref[...], _TRANS_B, preferred_element_type=jnp.float32
    ).astype(k_ref.dtype)
    v_ref[...] = jax.lax.dot_general(
        x, wv_ref[...], _TRANS_B, preferred_element_type=jnp.float32
    ).astype(v_ref.dtype)


def qkv_proj_pallas(x2d, wq, wk, wv):
    M, H = x2d.shape
    tm = _tile_rows(M, 256)
    tn = _tile_cols(H, 512)
    out = jax.ShapeDtypeStruct((M, H), x2d.dtype)
    return pl.pallas_call(
        qkv_proj_kernel,
        out_shape=(out, out, out),
        grid_spec=pltpu.PrefetchScalarGridSpec(
            num_scalar_prefetch=0,
            grid=(M // tm, H // tn),
            in_specs=[
                pl.BlockSpec((tm, H), lambda i, j: (i, 0)),   # x row-tile (resident across j)
                pl.BlockSpec((tn, H), lambda i, j: (j, 0)),   # Wq strip
                pl.BlockSpec((tn, H), lambda i, j: (j, 0)),   # Wk strip
                pl.BlockSpec((tn, H), lambda i, j: (j, 0)),   # Wv strip
            ],
            out_specs=(
                pl.BlockSpec((tm, tn), lambda i, j: (i, j)),
                pl.BlockSpec((tm, tn), lambda i, j: (i, j)),
                pl.BlockSpec((tm, tn), lambda i, j: (i, j)),
            ),
        ),
        compiler_params=pltpu.CompilerParams(
            dimension_semantics=("parallel", "parallel"),
            vmem_limit_bytes=64 * 1024 * 1024,
        ),
        cost_estimate=pl.CostEstimate(
            flops=2 * M * H * H * 3,
            transcendentals=0,
            bytes_accessed=4 * (M * H + 3 * H * H + 3 * M * H),
        ),
    )(x2d, wq, wk, wv)


# ---------------------------------------------------------------------------
# 2) causal multi-head attention core (online softmax)
# ---------------------------------------------------------------------------
def mha_kernel(q_ref, k_ref, v_ref, o_ref, m_sc, l_sc, acc_sc, *, scale, tq, tk):
    qi = pl.program_id(1)
    ki = pl.program_id(2)

    @pl.when(ki == 0)
    def _init():
        m_sc[...] = jnp.full(m_sc.shape, -jnp.inf, jnp.float32)
        l_sc[...] = jnp.zeros(l_sc.shape, jnp.float32)
        acc_sc[...] = jnp.zeros(acc_sc.shape, jnp.float32)

    # Skip KV tiles that are entirely in the masked (future) region.
    @pl.when(ki * tk <= qi * tq + (tq - 1))
    def _compute():
        # Pre-scale q: tq*hd multiplies instead of tq*tk on the scores.
        q = q_ref[0] * scale                                  # (tq, hd)
        k = k_ref[0]                                          # (tk, hd)
        v = v_ref[0]                                          # (tk, hd)

        s = jax.lax.dot_general(
            q, k, _TRANS_B, preferred_element_type=jnp.float32
        )                                                     # (tq, tk)

        # Causal mask: key index must not exceed query index (mask value = f32 min,
        # matching torch.finfo(torch.float32).min in the reference module).
        row = qi * tq + jax.lax.broadcasted_iota(jnp.int32, (tq, tk), 0)
        col = ki * tk + jax.lax.broadcasted_iota(jnp.int32, (tq, tk), 1)
        s = jnp.where(col <= row, s, jnp.finfo(jnp.float32).min)

        m_prev = m_sc[...]                                    # (tq, 1)
        m_new = jnp.maximum(m_prev, s.max(axis=-1, keepdims=True))
        alpha = jnp.exp(m_prev - m_new)
        p = jnp.exp(s - m_new)
        l_sc[...] = alpha * l_sc[...] + p.sum(axis=-1, keepdims=True)
        acc_sc[...] = alpha * acc_sc[...] + jnp.dot(
            p.astype(v.dtype), v, preferred_element_type=jnp.float32
        )
        m_sc[...] = m_new

    @pl.when(ki == pl.num_programs(2) - 1)
    def _finalize():
        inv_l = pl.reciprocal(l_sc[...], approx=False)        # (tq, 1)
        o_ref[0] = (acc_sc[...] * inv_l).astype(o_ref.dtype)


def mha_pallas(q, k, v, *, scale):
    BH, S, hd = q.shape
    tq = _tile_rows(S, 128)
    tk = _tile_rows(S, 128)
    kernel = functools.partial(mha_kernel, scale=scale, tq=tq, tk=tk)
    return pl.pallas_call(
        kernel,
        out_shape=jax.ShapeDtypeStruct((BH, S, hd), q.dtype),
        grid_spec=pltpu.PrefetchScalarGridSpec(
            num_scalar_prefetch=0,
            grid=(BH, S // tq, S // tk),
            in_specs=[
                pl.BlockSpec((1, tq, hd), lambda b, i, j: (b, i, 0)),
                pl.BlockSpec((1, tk, hd), lambda b, i, j: (b, j, 0)),
                pl.BlockSpec((1, tk, hd), lambda b, i, j: (b, j, 0)),
            ],
            out_specs=pl.BlockSpec((1, tq, hd), lambda b, i, j: (b, i, 0)),
            scratch_shapes=[
                pltpu.VMEM((tq, 1), jnp.float32),   # running max
                pltpu.VMEM((tq, 1), jnp.float32),   # running denom
                pltpu.VMEM((tq, hd), jnp.float32),  # output accumulator
            ],
        ),
        compiler_params=pltpu.CompilerParams(
            dimension_semantics=("parallel", "parallel", "arbitrary"),
            vmem_limit_bytes=64 * 1024 * 1024,
        ),
        cost_estimate=pl.CostEstimate(
            flops=4 * BH * S * S * hd,
            transcendentals=BH * S * S,
            bytes_accessed=4 * (4 * BH * S * hd),
        ),
    )(q, k, v)


# ---------------------------------------------------------------------------
# 3) output projection (generic x @ W.T)
# ---------------------------------------------------------------------------
def linear_kernel(x_ref, w_ref, o_ref):
    o_ref[...] = jax.lax.dot_general(
        x_ref[...], w_ref[...], _TRANS_B, preferred_element_type=jnp.float32
    ).astype(o_ref.dtype)


def linear_pallas(x2d, w):
    M, K = x2d.shape
    N = w.shape[0]
    tm = _tile_rows(M, 256)
    tn = _tile_cols(N, 512)
    return pl.pallas_call(
        linear_kernel,
        out_shape=jax.ShapeDtypeStruct((M, N), x2d.dtype),
        grid_spec=pltpu.PrefetchScalarGridSpec(
            num_scalar_prefetch=0,
            grid=(M // tm, N // tn),
            in_specs=[
                pl.BlockSpec((tm, K), lambda i, j: (i, 0)),
                pl.BlockSpec((tn, K), lambda i, j: (j, 0)),
            ],
            out_specs=pl.BlockSpec((tm, tn), lambda i, j: (i, j)),
        ),
        compiler_params=pltpu.CompilerParams(
            dimension_semantics=("parallel", "parallel"),
            vmem_limit_bytes=64 * 1024 * 1024,
        ),
        cost_estimate=pl.CostEstimate(
            flops=2 * M * K * N,
            transcendentals=0,
            bytes_accessed=4 * (M * K + K * N + M * N),
        ),
    )(x2d, w)


# ---------------------------------------------------------------------------
# full forward pass (matches PyTorch Attention.forward)
# ---------------------------------------------------------------------------
def attention_forward(hidden_states, w_q, w_k, w_v, w_o, num_head):
    """hidden_states: (B, S, H); w_*: (H, H) nn.Linear weights (out, in)."""
    B, S, H = hidden_states.shape
    hd = H // num_head
    x2d = hidden_states.reshape(B * S, H)

    q2d, k2d, v2d = qkv_proj_pallas(x2d, w_q, w_k, w_v)

    def split_heads(t2d):  # (B*S, H) -> (B*num_head, S, hd)   [cheap XLA reshapes]
        return (t2d.reshape(B, S, num_head, hd)
                   .transpose(0, 2, 1, 3)
                   .reshape(B * num_head, S, hd))

    q, k, v = split_heads(q2d), split_heads(k2d), split_heads(v2d)

    scale = 1.0 / (float(H) ** 0.5)   # module divides by sqrt(hidden_size), not sqrt(head_dim)
    attn_out = mha_pallas(q, k, v, scale=scale)               # (B*num_head, S, hd)

    merged = (attn_out.reshape(B, num_head, S, hd)            # merge_heads
                      .transpose(0, 2, 1, 3)
                      .reshape(B * S, H))
    out2d = linear_pallas(merged, w_o)
    return out2d.reshape(B, S, H)


if __name__ == "__main__":
    key = jax.random.PRNGKey(0)
    k_x, k_q, k_k, k_v, k_o = jax.random.split(key, 5)

    batch, seq, hidden, num_head = 2, 8, 32, 4   # max_len == seq (causal mask covers the sequence)
    x = jax.random.normal(k_x, (batch, seq, hidden), dtype=jnp.float32)

    bound = 1.0 / jnp.sqrt(hidden)
    w_q = jax.random.uniform(k_q, (hidden, hidden), jnp.float32, -bound, bound)
    w_k = jax.random.uniform(k_k, (hidden, hidden), jnp.float32, -bound, bound)
    w_v = jax.random.uniform(k_v, (hidden, hidden), jnp.float32, -bound, bound)
    w_o = jax.random.uniform(k_o, (hidden, hidden), jnp.float32, -bound, bound)

    out = attention_forward(x, w_q, w_k, w_v, w_o, num_head)
    out = jax.block_until_ready(out)

    # Pure-JAX reference mirroring the PyTorch module.
    def ref_attention(xin):
        B, S, H = xin.shape
        hd = H // num_head
        q = (xin @ w_q.T).reshape(B, S, num_head, hd).transpose(0, 2, 1, 3)
        k = (xin @ w_k.T).reshape(B, S, num_head, hd).transpose(0, 2, 1, 3)
        v = (xin @ w_v.T).reshape(B, S, num_head, hd).transpose(0, 2, 1, 3)
        scores = jnp.einsum("bhqd,bhkd->bhqk", q, k) / jnp.sqrt(jnp.float32(H))
        mask = jnp.tril(jnp.ones((S, S), dtype=bool))
        scores = jnp.where(mask[None, None], scores, jnp.finfo(jnp.float32).min)
        attn = jax.nn.softmax(scores, axis=-1)
        o = jnp.einsum("bhqk,bhkd->bhqd", attn, v)
        o = o.transpose(0, 2, 1, 3).reshape(B, S, H)
        return o @ w_o.T

    ref = ref_attention(x)
    assert out.shape == (batch, seq, hidden)
    assert jnp.allclose(out, ref, atol=1e-4, rtol=1e-4), float(jnp.max(jnp.abs(out - ref)))

    print("KERNEL_OK")
</pallas_src>

<mosaic_0001>
module attributes {stable_mosaic.version = 11 : i64} {
  func.func @qkv_proj_kernel(%arg0: i32, %arg1: i32, %arg2: memref<16x32xf32, #tpu.memory_space<vmem>>, %arg3: memref<32x32xf32, #tpu.memory_space<vmem>>, %arg4: memref<32x32xf32, #tpu.memory_space<vmem>>, %arg5: memref<32x32xf32, #tpu.memory_space<vmem>>, %arg6: memref<16x32xf32, #tpu.memory_space<vmem>>, %arg7: memref<16x32xf32, #tpu.memory_space<vmem>>, %arg8: memref<16x32xf32, #tpu.memory_space<vmem>>) attributes {dimension_semantics = [#tpu.dimension_semantics<parallel>, #tpu.dimension_semantics<parallel>], iteration_bounds = array<i64: 1, 1>, scalar_prefetch = 0 : i64, scratch_operands = 0 : i64, tpu.core_type = #tpu.core_type<tc>, window_params = [{transform_indices = @transform_0, window_bounds = array<i64: 16, 32>}, {transform_indices = @transform_1, window_bounds = array<i64: 32, 32>}, {transform_indices = @transform_2, window_bounds = array<i64: 32, 32>}, {transform_indices = @transform_3, window_bounds = array<i64: 32, 32>}, {transform_indices = @transform_4, window_bounds = array<i64: 16, 32>}, {transform_indices = @transform_5, window_bounds = array<i64: 16, 32>}, {transform_indices = @transform_6, window_bounds = array<i64: 16, 32>}]} {
    %c0 = arith.constant 0 : index
    %c0_0 = arith.constant 0 : index
    %0 = vector.load %arg2[%c0, %c0_0] : memref<16x32xf32, #tpu.memory_space<vmem>>, vector<16x32xf32>
    %c0_1 = arith.constant 0 : index
    %c0_2 = arith.constant 0 : index
    %1 = vector.load %arg3[%c0_1, %c0_2] : memref<32x32xf32, #tpu.memory_space<vmem>>, vector<32x32xf32>
    %cst = arith.constant dense<0.000000e+00> : vector<16x32xf32>
    %2 = tpu.matmul %0, %1, %cst {dimension_numbers = #tpu.dot_dimension_numbers<[1], [1], [0], [0], [0, 0, 1, 0], [], []>} : vector<16x32xf32>, vector<32x32xf32>, vector<16x32xf32> -> vector<16x32xf32>
    %c0_3 = arith.constant 0 : index
    %c0_4 = arith.constant 0 : index
    %3 = vector.load %arg6[%c0_3, %c0_4] : memref<16x32xf32, #tpu.memory_space<vmem>>, vector<16x32xf32>
    tpu.vector_store %arg6[%c0_3, %c0_4], %2 {strides = array<i32>} : memref<16x32xf32, #tpu.memory_space<vmem>>, vector<16x32xf32>,
    %c0_5 = arith.constant 0 : index
    %c0_6 = arith.constant 0 : index
    %4 = vector.load %arg4[%c0_5, %c0_6] : memref<32x32xf32, #tpu.memory_space<vmem>>, vector<32x32xf32>
    %cst_7 = arith.constant dense<0.000000e+00> : vector<16x32xf32>
    %5 = tpu.matmul %0, %4, %cst_7 {dimension_numbers = #tpu.dot_dimension_numbers<[1], [1], [0], [0], [0, 0, 1, 0], [], []>} : vector<16x32xf32>, vector<32x32xf32>, vector<16x32xf32> -> vector<16x32xf32>
    %c0_8 = arith.constant 0 : index
    %c0_9 = arith.constant 0 : index
    %6 = vector.load %arg7[%c0_8, %c0_9] : memref<16x32xf32, #tpu.memory_space<vmem>>, vector<16x32xf32>
    tpu.vector_store %arg7[%c0_8, %c0_9], %5 {strides = array<i32>} : memref<16x32xf32, #tpu.memory_space<vmem>>, vector<16x32xf32>,
    %c0_10 = arith.constant 0 : index
    %c0_11 = arith.constant 0 : index
    %7 = vector.load %arg5[%c0_10, %c0_11] : memref<32x32xf32, #tpu.memory_space<vmem>>, vector<32x32xf32>
    %cst_12 = arith.constant dense<0.000000e+00> : vector<16x32xf32>
    %8 = tpu.matmul %0, %7, %cst_12 {dimension_numbers = #tpu.dot_dimension_numbers<[1], [1], [0], [0], [0, 0, 1, 0], [], []>} : vector<16x32xf32>, vector<32x32xf32>, vector<16x32xf32> -> vector<16x32xf32>
    %c0_13 = arith.constant 0 : index
    %c0_14 = arith.constant 0 : index
    %9 = vector.load %arg8[%c0_13, %c0_14] : memref<16x32xf32, #tpu.memory_space<vmem>>, vector<16x32xf32>
    tpu.vector_store %arg8[%c0_13, %c0_14], %8 {strides = array<i32>} : memref<16x32xf32, #tpu.memory_space<vmem>>, vector<16x32xf32>,
    return
  }
  func.func @transform_0(%arg0: i32, %arg1: i32) -> (i32, i32) {
    %c0_i32 = arith.constant 0 : i32
    %c0_i32_0 = arith.constant 0 : i32
    return %arg0, %c0_i32 : i32, i32
  }
  func.func @transform_1(%arg0: i32, %arg1: i32) -> (i32, i32) {
    %c0_i32 = arith.constant 0 : i32
    %c0_i32_0 = arith.constant 0 : i32
    return %arg1, %c0_i32 : i32, i32
  }
  func.func @transform_2(%arg0: i32, %arg1: i32) -> (i32, i32) {
    %c0_i32 = arith.constant 0 : i32
    %c0_i32_0 = arith.constant 0 : i32
    return %arg1, %c0_i32 : i32, i32
  }
  func.func @transform_3(%arg0: i32, %arg1: i32) -> (i32, i32) {
    %c0_i32 = arith.constant 0 : i32
    %c0_i32_0 = arith.constant 0 : i32
    return %arg1, %c0_i32 : i32, i32
  }
  func.func @transform_4(%arg0: i32, %arg1: i32) -> (i32, i32) {
    %c0_i32 = arith.constant 0 : i32
    return %arg0, %arg1 : i32, i32
  }
  func.func @transform_5(%arg0: i32, %arg1: i32) -> (i32, i32) {
    %c0_i32 = arith.constant 0 : i32
    return %arg0, %arg1 : i32, i32
  }
  func.func @transform_6(%arg0: i32, %arg1: i32) -> (i32, i32) {
    %c0_i32 = arith.constant 0 : i32
    return %arg0, %arg1 : i32, i32
  }
}

</mosaic_0001>

<llo_original>
// kernel: tpu_custom_call.1
$region0: #{tpu_custom_call.1}
  #allocation0 [shape = 'u32[]', space=smem, size = 0x4, offset = 0x4, fixed_abs, tag = 'smem constant byte address 0x4 - core index']
  #allocation1 [shape = 'u32[144,128]{1,0:T(1,128)}', space=vmem, size = 0x12000, scoped, tag = 'internal scratch']
  %s0 = inlined_call_operand.hbm [shape: f32[16,32], index: 0, kind: input, shape index: {}]
  %s1 = inlined_call_operand.hbm [shape: f32[32,32], index: 1, kind: input, shape index: {}]
  %s2 = inlined_call_operand.hbm [shape: f32[32,32], index: 2, kind: input, shape index: {}]
  %s3 = inlined_call_operand.hbm [shape: f32[32,32], index: 3, kind: input, shape index: {}]
  %s4 = inlined_call_operand.hbm [shape: f32[16,32], index: 4, kind: output, shape index: {0}]
  %s5 = inlined_call_operand.hbm [shape: f32[16,32], index: 5, kind: output, shape index: {1}]
  %s6 = inlined_call_operand.hbm [shape: f32[16,32], index: 6, kind: output, shape index: {2}]
  %7 = xla_tuple %s4, %s5, %s6
  %s8 = sld [smem:[#allocation0]]
  $region58: #{tpu_custom_call.1} parent=0
    _
  %s10 = ssub.s32 1, %s8
  %s11 = scalar_select 0, %s10, %s8
  $region1: #{tpu_custom_call.1} parent=0
    #allocation2 [shape = 'u8[8192]{0}', space=vmem, size = 0x2000, scoped, tag = 'input window, operand 0, single buffered']
    #allocation3 [shape = 's32[1]{0}', space=sflag, size = 0x4, scoped, tag = 'scoped memory for tpu_custom_call.1']
    #allocation4 [shape = 's32[1]{0}', space=sflag, size = 0x4, scoped, tag = 'scoped memory for tpu_custom_call.1']
    #allocation5 [shape = 'u8[16384]{0}', space=vmem, size = 0x4000, scoped, tag = 'input window, operand 1, single buffered']
    #allocation6 [shape = 's32[1]{0}', space=sflag, size = 0x4, scoped, tag = 'scoped memory for tpu_custom_call.1']
    #allocation7 [shape = 'u8[16384]{0}', space=vmem, size = 0x4000, scoped, tag = 'input window, operand 2, single buffered']
    #allocation8 [shape = 'u8[16384]{0}', space=vmem, size = 0x4000, scoped, tag = 'input window, operand 3, single buffered']
    #allocation9 [shape = 's32[1]{0}', space=sflag, size = 0x4, scoped, tag = 'scoped memory for tpu_custom_call.1']
    #allocation10 [shape = 'u8[8192]{0}', space=vmem, size = 0x2000, scoped, tag = 'output window, operand 0, single buffered']
    #allocation11 [shape = 'u8[8192]{0}', space=vmem, size = 0x2000, scoped, tag = 'output window, operand 1, single buffered']
    #allocation12 [shape = 's32[1]{0}', space=sflag, size = 0x4, scoped, tag = 'scoped memory for tpu_custom_call.1']
    #allocation13 [shape = 'u8[8192]{0}', space=vmem, size = 0x2000, scoped, tag = 'output window, operand 2, single buffered']
    %12 = vsyncpa [#allocation3], 0
    %13 = vsyncpa [#allocation6], 0
    %14 = vsyncpa [#allocation9], 0
    %15 = vsyncpa [#allocation4], 0
    %16 = vsyncpa [#allocation12], 0
    // Predicated region
    $region2: #{tpu_custom_call.1} parent=1 // pred_check
      _
    $region3: #{tpu_custom_call.1} parent=1 // pred_check_branch
      %18 = sbr.rel (0) target = $region5
    $region4: #{tpu_custom_call.1} parent=1 // pred_region
      %s20 = ssub.s32 256, 256
      %21 = vsyncadd [#allocation3], %s20
      %s22 = sshll.u32 [#allocation2], 4
      %s23 = int_to_ptr.vmem [resolvable:$true] %s22
      %28 = dma.hbm_to_vmem [thread:$0]  %s0, 256, %s23, [#allocation3], 128, 128, 8
    $region5: #{tpu_custom_call.1} parent=1 // pred_fallthru
      _
    // Predicated region
    $region6: #{tpu_custom_call.1} parent=1 // pred_check
      _
    $region7: #{tpu_custom_call.1} parent=1 // pred_check_branch
      %30 = sbr.rel (0) target = $region9
    $region8: #{tpu_custom_call.1} parent=1 // pred_region
      %s32 = ssub.s32 512, 512
      %33 = vsyncadd [#allocation6], %s32
      %s34 = sshll.u32 [#allocation5], 4
      %s35 = int_to_ptr.vmem [resolvable:$true] %s34
      %40 = dma.hbm_to_vmem [thread:$0]  %s1, 512, %s35, [#allocation6], 128, 128, 8
    $region9: #{tpu_custom_call.1} parent=1 // pred_fallthru
      _
    // Predicated region
    $region10: #{tpu_custom_call.1} parent=1 // pred_check
      _
    $region11: #{tpu_custom_call.1} parent=1 // pred_check_branch
      %42 = sbr.rel (0) target = $region13
    $region12: #{tpu_custom_call.1} parent=1 // pred_region
      %s44 = ssub.s32 512, 512
      %45 = vsyncadd [#allocation6], %s44
      %s46 = sshll.u32 [#allocation7], 4
      %s47 = int_to_ptr.vmem [resolvable:$true] %s46
      %52 = dma.hbm_to_vmem [thread:$0]  %s2, 512, %s47, [#allocation6], 128, 128, 8
    $region13: #{tpu_custom_call.1} parent=1 // pred_fallthru
      _
    // Predicated region
    $region14: #{tpu_custom_call.1} parent=1 // pred_check
      _
    $region15: #{tpu_custom_call.1} parent=1 // pred_check_branch
      %54 = sbr.rel (0) target = $region17
    $region16: #{tpu_custom_call.1} parent=1 // pred_region
      %s56 = ssub.s32 512, 512
      %57 = vsyncadd [#allocation9], %s56
      %s58 = sshll.u32 [#allocation8], 4
      %s59 = int_to_ptr.vmem [resolvable:$true] %s58
      %64 = dma.hbm_to_vmem [thread:$0]  %s3, 512, %s59, [#allocation9], 128, 128, 8
    $region17: #{tpu_custom_call.1} parent=1 // pred_fallthru
      _
    // Predicated region
    $region18: #{tpu_custom_call.1} parent=1 // pred_check
      _
    $region19: #{tpu_custom_call.1} parent=1 // pred_check_branch
      %66 = sbr.rel (0) target = $region21
    $region20: #{tpu_custom_call.1} parent=1 // pred_region
      %67 = dma.done [#allocation3], 256
    $region21: #{tpu_custom_call.1} parent=1 // pred_fallthru
      _
    // Predicated region
    $region22: #{tpu_custom_call.1} parent=1 // pred_check
      _
    $region23: #{tpu_custom_call.1} parent=1 // pred_check_branch
      %69 = sbr.rel (0) target = $region25
    $region24: #{tpu_custom_call.1} parent=1 // pred_region
      %70 = dma.done [#allocation6], 512
    $region25: #{tpu_custom_call.1} parent=1 // pred_fallthru
      _
    // Predicated region
    $region26: #{tpu_custom_call.1} parent=1 // pred_check
      _
    $region27: #{tpu_custom_call.1} parent=1 // pred_check_branch
      %72 = sbr.rel (0) target = $region29
    $region28: #{tpu_custom_call.1} parent=1 // pred_region
      %73 = dma.done [#allocation6], 512
    $region29: #{tpu_custom_call.1} parent=1 // pred_fallthru
      _
    // Predicated region
    $region30: #{tpu_custom_call.1} parent=1 // pred_check
      _
    $region31: #{tpu_custom_call.1} parent=1 // pred_check_branch
      %75 = sbr.rel (0) target = $region33
    $region32: #{tpu_custom_call.1} parent=1 // pred_region
      %76 = dma.done [#allocation9], 512
    $region33: #{tpu_custom_call.1} parent=1 // pred_fallthru
      _
    %v77 = vld [vmem:[#allocation2] sm:$0xff]
    %v78 = vld [vmem:[#allocation2 + $0x8] sm:$0xff]
    %v79 = vld [vmem:[#allocation5] sm:$0xff]
    %v80 = vld [vmem:[#allocation5 + $0x8] sm:$0xff]
    %v81 = vld [vmem:[#allocation5 + $0x10] sm:$0xff]
    %v82 = vld [vmem:[#allocation5 + $0x18] sm:$0xff]
    %vm83 = vcmask 261120
    %v85 = vsel %vm83, %v77, 0
    %v88 = vsel %vm83, %v78, 0
    %v91 = vsel %vm83, %v79, 0
    %v94 = vsel %vm83, %v80, 0
    %v97 = vsel %vm83, %v81, 0
    %v100 = vsel %vm83, %v82, 0
    %102 = vmatprep.subr.mxu0 0.0
    %103 = vmatpush1.xpose.msra.mxu0 0.0
    %104 = vmatprep.subr.mxu0 0.0
    %105 = vmatpush1.xpose.msra.mxu0 0.0
    %106 = vmatprep.subr.mxu0 0.0
    %107 = vmatpush1.xpose.msra.mxu0 0.0
    %108 = vmatprep.subr.mxu0 0.0
    %109 = vmatpush1.xpose.msra.mxu0 0.0
    %110 = vmatprep.subr.mxu0 0.0
    %111 = vmatpush1.xpose.msra.mxu0 0.0
    %112 = vmatprep.subr.mxu0 0.0
    %113 = vmatpush1.xpose.msra.mxu0 0.0
    %114 = vmatprep.subr.mxu0 0.0
    %115 = vmatpush1.xpose.msra.mxu0 0.0
    %116 = vmatprep.subr.mxu0 0.0
    %117 = vmatpush1.xpose.msra.mxu0 0.0
    %118 = vmatprep.subr.mxu0 0.0
    %119 = vmatpush1.xpose.msra.mxu0 0.0
    %120 = vmatprep.subr.mxu0 0.0
    %121 = vmatpush1.xpose.msra.mxu0 0.0
    %122 = vmatprep.subr.mxu0 0.0
    %123 = vmatpush1.xpose.msra.mxu0 0.0
    %124 = vmatprep.subr.mxu0 0.0
    %125 = vmatpush1.xpose.msra.mxu0 0.0
    %126 = vmatprep.subr.mxu0 0.0
    %127 = vmatpush1.xpose.msra.mxu0 %v100
    %128 = vmatprep.subr.mxu0 0.0
    %129 = vmatpush1.xpose.msra.mxu0 %v97
    %130 = vmatprep.subr.mxu0 0.0
    %131 = vmatpush1.xpose.msra.mxu0 %v94
    %132 = vmatprep.subr.mxu0 0.0
    %133 = vmatpush1.xpose.msra.mxu0 %v91
    %134 = vmatprep.subr.mxu0 0.0
    %135 = vmatpush2.xpose.msra.mxu0 0.0
    %136 = vmatprep.subr.mxu0 0.0
    %137 = vmatpush2.xpose.msra.mxu0 0.0
    %138 = vmatprep.subr.mxu0 0.0
    %139 = vmatpush2.xpose.msra.mxu0 0.0
    %140 = vmatprep.subr.mxu0 0.0
    %141 = vmatpush2.xpose.msra.mxu0 0.0
    %142 = vmatprep.subr.mxu0 0.0
    %143 = vmatpush2.xpose.msra.mxu0 0.0
    %144 = vmatprep.subr.mxu0 0.0
    %145 = vmatpush2.xpose.msra.mxu0 0.0
    %146 = vmatprep.subr.mxu0 0.0
    %147 = vmatpush2.xpose.msra.mxu0 0.0
    %148 = vmatprep.subr.mxu0 0.0
    %149 = vmatpush2.xpose.msra.mxu0 0.0
    %150 = vmatprep.subr.mxu0 0.0
    %151 = vmatpush2.xpose.msra.mxu0 0.0
    %152 = vmatprep.subr.mxu0 0.0
    %153 = vmatpush2.xpose.msra.mxu0 0.0
    %154 = vmatprep.subr.mxu0 0.0
    %155 = vmatpush2.xpose.msra.mxu0 0.0
    %156 = vmatprep.subr.mxu0 0.0
    %157 = vmatpush2.xpose.msra.mxu0 0.0
    %158 = vmatprep.subr.mxu0 0.0
    %159 = vmatpush2.xpose.msra.mxu0 0.0
    %160 = vmatprep.subr.mxu0 0.0
    %161 = vmatpush2.xpose.msra.mxu0 0.0
    %162 = vmatprep.subr.mxu0 0.0
    %163 = vmatpush2.xpose.msra.mxu0 0.0
    %164 = vmatprep.subr.mxu0 0.0
    %165 = vmatpush2.xpose.msra.mxu0 0.0
    %166 = vmatprep.mubr.f32.mxu0 0.0
    %167 = vmatmul.mubr.f32.gmra.mxu0 %v85
    %v168 = vpop.f32.mrf.mxu0
    %v169 = vadd.f32 0.0, %v168
    %v170 = vpop.f32.mrf.mxu0
    %171 = vmatprep.mubr.f32.mxu0 0.0
    %172 = vmatmul.mubr.f32.gmra.mxu0 %v88
    %v173 = vpop.f32.mrf.mxu0
    %v174 = vadd.f32 0.0, %v173
    %v175 = vpop.f32.mrf.mxu0
    %176 = vdwg.mxu0
    %177 = vst.msk [vmem:[#allocation10] sm:$0xff] %vm83, %v169
    %178 = vst.msk [vmem:[#allocation10 + $0x8] sm:$0xff] %vm83, %v174
    %v179 = vld [vmem:[#allocation7] sm:$0xff]
    %v180 = vld [vmem:[#allocation7 + $0x8] sm:$0xff]
    %v181 = vld [vmem:[#allocation7 + $0x10] sm:$0xff]
    %v182 = vld [vmem:[#allocation7 + $0x18] sm:$0xff]
    %v184 = vsel %vm83, %v179, 0
    %v187 = vsel %vm83, %v180, 0
    %v190 = vsel %vm83, %v181, 0
    %v193 = vsel %vm83, %v182, 0
    %195 = vmatprep.subr.mxu0 0.0
    %196 = vmatpush1.xpose.msra.mxu0 0.0
    %197 = vmatprep.subr.mxu0 0.0
    %198 = vmatpush1.xpose.msra.mxu0 0.0
    %199 = vmatprep.subr.mxu0 0.0
    %200 = vmatpush1.xpose.msra.mxu0 0.0
    %201 = vmatprep.subr.mxu0 0.0
    %202 = vmatpush1.xpose.msra.mxu0 0.0
    %203 = vmatprep.subr.mxu0 0.0
    %204 = vmatpush1.xpose.msra.mxu0 0.0
    %205 = vmatprep.subr.mxu0 0.0
    %206 = vmatpush1.xpose.msra.mxu0 0.0
    %207 = vmatprep.subr.mxu0 0.0
    %208 = vmatpush1.xpose.msra.mxu0 0.0
    %209 = vmatprep.subr.mxu0 0.0
    %210 = vmatpush1.xpose.msra.mxu0 0.0
    %211 = vmatprep.subr.mxu0 0.0
    %212 = vmatpush1.xpose.msra.mxu0 0.0
    %213 = vmatprep.subr.mxu0 0.0
    %214 = vmatpush1.xpose.msra.mxu0 0.0
    %215 = vmatprep.subr.mxu0 0.0
    %216 = vmatpush1.xpose.msra.mxu0 0.0
    %217 = vmatprep.subr.mxu0 0.0
    %218 = vmatpush1.xpose.msra.mxu0 0.0
    %219 = vmatprep.subr.mxu0 0.0
    %220 = vmatpush1.xpose.msra.mxu0 %v193
    %221 = vmatprep.subr.mxu0 0.0
    %222 = vmatpush1.xpose.msra.mxu0 %v190
    %223 = vmatprep.subr.mxu0 0.0
    %224 = vmatpush1.xpose.msra.mxu0 %v187
    %225 = vmatprep.subr.mxu0 0.0
    %226 = vmatpush1.xpose.msra.mxu0 %v184
    %227 = vmatprep.subr.mxu0 0.0
    %228 = vmatpush2.xpose.msra.mxu0 0.0
    %229 = vmatprep.subr.mxu0 0.0
    %230 = vmatpush2.xpose.msra.mxu0 0.0
    %231 = vmatprep.subr.mxu0 0.0
    %232 = vmatpush2.xpose.msra.mxu0 0.0
    %233 = vmatprep.subr.mxu0 0.0
    %234 = vmatpush2.xpose.msra.mxu0 0.0
    %235 = vmatprep.subr.mxu0 0.0
    %236 = vmatpush2.xpose.msra.mxu0 0.0
    %237 = vmatprep.subr.mxu0 0.0
    %238 = vmatpush2.xpose.msra.mxu0 0.0
    %239 = vmatprep.subr.mxu0 0.0
    %240 = vmatpush2.xpose.msra.mxu0 0.0
    %241 = vmatprep.subr.mxu0 0.0
    %242 = vmatpush2.xpose.msra.mxu0 0.0
    %243 = vmatprep.subr.mxu0 0.0
    %244 = vmatpush2.xpose.msra.mxu0 0.0
    %245 = vmatprep.subr.mxu0 0.0
    %246 = vmatpush2.xpose.msra.mxu0 0.0
    %247 = vmatprep.subr.mxu0 0.0
    %248 = vmatpush2.xpose.msra.mxu0 0.0
    %249 = vmatprep.subr.mxu0 0.0
    %250 = vmatpush2.xpose.msra.mxu0 0.0
    %251 = vmatprep.subr.mxu0 0.0
    %252 = vmatpush2.xpose.msra.mxu0 0.0
    %253 = vmatprep.subr.mxu0 0.0
    %254 = vmatpush2.xpose.msra.mxu0 0.0
    %255 = vmatprep.subr.mxu0 0.0
    %256 = vmatpush2.xpose.msra.mxu0 0.0
    %257 = vmatprep.subr.mxu0 0.0
    %258 = vmatpush2.xpose.msra.mxu0 0.0
    %259 = vmatprep.mubr.f32.mxu0 0.0
    %260 = vmatmul.mubr.f32.gmra.mxu0 %v85
    %v261 = vpop.f32.mrf.mxu0
    %v262 = vadd.f32 0.0, %v261
    %v263 = vpop.f32.mrf.mxu0
    %264 = vmatprep.mubr.f32.mxu0 0.0
    %265 = vmatmul.mubr.f32.gmra.mxu0 %v88
    %v266 = vpop.f32.mrf.mxu0
    %v267 = vadd.f32 0.0, %v266
    %v268 = vpop.f32.mrf.mxu0
    %269 = vdwg.mxu0
    %270 = vst.msk [vmem:[#allocation11] sm:$0xff] %vm83, %v262
    %271 = vst.msk [vmem:[#allocation11 + $0x8] sm:$0xff] %vm83, %v267
    %v272 = vld [vmem:[#allocation8] sm:$0xff]
    %v273 = vld [vmem:[#allocation8 + $0x8] sm:$0xff]
    %v274 = vld [vmem:[#allocation8 + $0x10] sm:$0xff]
    %v275 = vld [vmem:[#allocation8 + $0x18] sm:$0xff]
    %v277 = vsel %vm83, %v272, 0
    %v280 = vsel %vm83, %v273, 0
    %v283 = vsel %vm83, %v274, 0
    %v286 = vsel %vm83, %v275, 0
    %288 = vmatprep.subr.mxu0 0.0
    %289 = vmatpush1.xpose.msra.mxu0 0.0
    %290 = vmatprep.subr.mxu0 0.0
    %291 = vmatpush1.xpose.msra.mxu0 0.0
    %292 = vmatprep.subr.mxu0 0.0
    %293 = vmatpush1.xpose.msra.mxu0 0.0
    %294 = vmatprep.subr.mxu0 0.0
    %295 = vmatpush1.xpose.msra.mxu0 0.0
    %296 = vmatprep.subr.mxu0 0.0
    %297 = vmatpush1.xpose.msra.mxu0 0.0
    %298 = vmatprep.subr.mxu0 0.0
    %299 = vmatpush1.xpose.msra.mxu0 0.0
    %300 = vmatprep.subr.mxu0 0.0
    %301 = vmatpush1.xpose.msra.mxu0 0.0
    %302 = vmatprep.subr.mxu0 0.0
    %303 = vmatpush1.xpose.msra.mxu0 0.0
    %304 = vmatprep.subr.mxu0 0.0
    %305 = vmatpush1.xpose.msra.mxu0 0.0
    %306 = vmatprep.subr.mxu0 0.0
    %307 = vmatpush1.xpose.msra.mxu0 0.0
    %308 = vmatprep.subr.mxu0 0.0
    %309 = vmatpush1.xpose.msra.mxu0 0.0
    %310 = vmatprep.subr.mxu0 0.0
    %311 = vmatpush1.xpose.msra.mxu0 0.0
    %312 = vmatprep.subr.mxu0 0.0
    %313 = vmatpush1.xpose.msra.mxu0 %v286
    %314 = vmatprep.subr.mxu0 0.0
    %315 = vmatpush1.xpose.msra.mxu0 %v283
    %316 = vmatprep.subr.mxu0 0.0
    %317 = vmatpush1.xpose.msra.mxu0 %v280
    %318 = vmatprep.subr.mxu0 0.0
    %319 = vmatpush1.xpose.msra.mxu0 %v277
    %320 = vmatprep.subr.mxu0 0.0
    %321 = vmatpush2.xpose.msra.mxu0 0.0
    %322 = vmatprep.subr.mxu0 0.0
    %323 = vmatpush2.xpose.msra.mxu0 0.0
    %324 = vmatprep.subr.mxu0 0.0
    %325 = vmatpush2.xpose.msra.mxu0 0.0
    %326 = vmatprep.subr.mxu0 0.0
    %327 = vmatpush2.xpose.msra.mxu0 0.0
    %328 = vmatprep.subr.mxu0 0.0
    %329 = vmatpush2.xpose.msra.mxu0 0.0
    %330 = vmatprep.subr.mxu0 0.0
    %331 = vmatpush2.xpose.msra.mxu0 0.0
    %332 = vmatprep.subr.mxu0 0.0
    %333 = vmatpush2.xpose.msra.mxu0 0.0
    %334 = vmatprep.subr.mxu0 0.0
    %335 = vmatpush2.xpose.msra.mxu0 0.0
    %336 = vmatprep.subr.mxu0 0.0
    %337 = vmatpush2.xpose.msra.mxu0 0.0
    %338 = vmatprep.subr.mxu0 0.0
    %339 = vmatpush2.xpose.msra.mxu0 0.0
    %340 = vmatprep.subr.mxu0 0.0
    %341 = vmatpush2.xpose.msra.mxu0 0.0
    %342 = vmatprep.subr.mxu0 0.0
    %343 = vmatpush2.xpose.msra.mxu0 0.0
    %344 = vmatprep.subr.mxu0 0.0
    %345 = vmatpush2.xpose.msra.mxu0 0.0
    %346 = vmatprep.subr.mxu0 0.0
    %347 = vmatpush2.xpose.msra.mxu0 0.0
    %348 = vmatprep.subr.mxu0 0.0
    %349 = vmatpush2.xpose.msra.mxu0 0.0
    %350 = vmatprep.subr.mxu0 0.0
    %351 = vmatpush2.xpose.msra.mxu0 0.0
    %352 = vmatprep.mubr.f32.mxu0 0.0
    %353 = vmatmul.mubr.f32.gmra.mxu0 %v85
    %v354 = vpop.f32.mrf.mxu0
    %v355 = vadd.f32 0.0, %v354
    %v356 = vpop.f32.mrf.mxu0
    %357 = vmatprep.mubr.f32.mxu0 0.0
    %358 = vmatmul.mubr.f32.gmra.mxu0 %v88
    %v359 = vpop.f32.mrf.mxu0
    %v360 = vadd.f32 0.0, %v359
    %v361 = vpop.f32.mrf.mxu0
    %362 = vdwg.mxu0
    %363 = vst.msk [vmem:[#allocation13] sm:$0xff] %vm83, %v355
    %364 = vst.msk [vmem:[#allocation13 + $0x8] sm:$0xff] %vm83, %v360
    // Predicated region
    $region34: #{tpu_custom_call.1} parent=1 // pred_check
      _
    $region35: #{tpu_custom_call.1} parent=1 // pred_check_branch
      %366 = sbr.rel (0) target = $region37
    $region36: #{tpu_custom_call.1} parent=1 // pred_region
      %s368 = ssub.s32 256, 256
      %369 = vsyncadd [#allocation4], %s368
      %s370 = sshll.u32 [#allocation10], 4
      %s371 = int_to_ptr.vmem [resolvable:$true] %s370
      %376 = dma.vmem_to_hbm [thread:$0]  %s371, 256, %s4, [#allocation4], 128, 128, 8
    $region37: #{tpu_custom_call.1} parent=1 // pred_fallthru
      _
    // Predicated region
    $region38: #{tpu_custom_call.1} parent=1 // pred_check
      _
    $region39: #{tpu_custom_call.1} parent=1 // pred_check_branch
      %378 = sbr.rel (0) target = $region41
    $region40: #{tpu_custom_call.1} parent=1 // pred_region
      %s380 = ssub.s32 256, 256
      %381 = vsyncadd [#allocation12], %s380
      %s382 = sshll.u32 [#allocation11], 4
      %s383 = int_to_ptr.vmem [resolvable:$true] %s382
      %388 = dma.vmem_to_hbm [thread:$0]  %s383, 256, %s5, [#allocation12], 128, 128, 8
    $region41: #{tpu_custom_call.1} parent=1 // pred_fallthru
      _
    // Predicated region
    $region42: #{tpu_custom_call.1} parent=1 // pred_check
      _
    $region43: #{tpu_custom_call.1} parent=1 // pred_check_branch
      %390 = sbr.rel (0) target = $region45
    $region44: #{tpu_custom_call.1} parent=1 // pred_region
      %s392 = ssub.s32 256, 256
      %393 = vsyncadd [#allocation12], %s392
      %s394 = sshll.u32 [#allocation13], 4
      %s395 = int_to_ptr.vmem [resolvable:$true] %s394
      %400 = dma.vmem_to_hbm [thread:$0]  %s395, 256, %s6, [#allocation12], 128, 128, 8
    $region45: #{tpu_custom_call.1} parent=1 // pred_fallthru
      _
    // Predicated region
    $region46: #{tpu_custom_call.1} parent=1 // pred_check
      _
    $region47: #{tpu_custom_call.1} parent=1 // pred_check_branch
      %402 = sbr.rel (0) target = $region49
    $region48: #{tpu_custom_call.1} parent=1 // pred_region
      %403 = dma.done [#allocation4], 256
    $region49: #{tpu_custom_call.1} parent=1 // pred_fallthru
      _
    // Predicated region
    $region50: #{tpu_custom_call.1} parent=1 // pred_check
      _
    $region51: #{tpu_custom_call.1} parent=1 // pred_check_branch
      %405 = sbr.rel (0) target = $region53
    $region52: #{tpu_custom_call.1} parent=1 // pred_region
      %406 = dma.done [#allocation12], 256
    $region53: #{tpu_custom_call.1} parent=1 // pred_fallthru
      _
    // Predicated region
    $region54: #{tpu_custom_call.1} parent=1 // pred_check
      _
    $region55: #{tpu_custom_call.1} parent=1 // pred_check_branch
      %408 = sbr.rel (0) target = $region57
    $region56: #{tpu_custom_call.1} parent=1 // pred_region
      %409 = dma.done [#allocation12], 256
    $region57: #{tpu_custom_call.1} parent=1 // pred_fallthru
      _
    %410 = vsyncpa [#allocation3], 1
    %411 = vsyncpa [#allocation6], 1
    %412 = vsyncpa [#allocation9], 1
    %413 = vsyncpa [#allocation4], 1
    %414 = vsyncpa [#allocation12], 1

</llo_original>
